<compile_context>
chip_gen: v6e
topology: v6e:2x2x1
jax: 0.10.0
libtpu: 0.0.40
codegen_flags: <defaults>
</compile_context>

<pallas_src>
import functools

import jax
import jax.numpy as jnp
from jax.experimental import pallas as pl
from jax.experimental.pallas import tpu as pltpu


def _highpass_kernel(x_ref, m_ref, o_ref, *, W, HWp):
    # x_ref / o_ref: (bc, HWp) -- each row is one flattened (H, W) plane
    #                (padded to HWp = ceil(H*W / 128) * 128).
    # m_ref:        (8, HWp)  -- rows 0..3 are the 0/1 boundary masks
    #                (not_top, not_bot, not_left, not_right); rows 4..7 unused.
    x = x_ref[...]
    if x.dtype != jnp.float32:
        x = x.astype(jnp.float32)

    not_top = m_ref[0:1, :]      # 0 on row 0         (broadcast over planes)
    not_bot = m_ref[1:2, :]      # 0 on row H-1
    not_left = m_ref[2:3, :]     # 0 on col 0
    not_right = m_ref[3:4, :]    # 0 on col W-1

    # roll semantics: result[i] = x[(i - shift) mod HWp]; per-row, so the
    # wrap-around never crosses plane boundaries.
    down = pltpu.roll(x, shift=W, axis=1)        # value from row r-1
    up = pltpu.roll(x, shift=HWp - W, axis=1)    # value from row r+1
    v = x + down * not_top + up * not_bot        # vertical 3-tap, zero halo

    left = pltpu.roll(v, shift=1, axis=1)        # value from col c-1
    right = pltpu.roll(v, shift=HWp - 1, axis=1)  # value from col c+1
    s = v + left * not_left + right * not_right  # 3x3 box sum, zero halo

    # box_sum - 9*center == [[1,1,1],[1,-8,1],[1,1,1]] filter.
    o_ref[...] = (s - 9.0 * x).astype(o_ref.dtype)


def high_pass(x):
    """Depthwise 3x3 high-pass filter, equivalent to the PyTorch HighPass module.

    x: (N, C, H, W) float -> (N, C, H, W) same dtype.
    """
    N, C, H, W = x.shape
    P = N * C
    HW = H * W
    HWp = ((HW + 127) // 128) * 128          # lane-dense (unmasked) stores
    itemsize = jnp.dtype(x.dtype).itemsize

    # Free (contiguous) reshape: one row per image-channel plane.
    x2 = x.reshape(P, HW)
    if HWp != HW:
        x2 = jnp.pad(x2, ((0, 0), (0, HWp - HW)))

    # Precompute the four 0/1 boundary masks once (replaces in-kernel iota,
    # modulo, compares and selects). Packed into an 8-row slab so the block
    # shape is trivially (8,128)-aligned; it stays resident across the grid.
    pos = jnp.arange(HWp, dtype=jnp.int32)
    row = pos // W
    col = pos % W
    valid = pos < HW
    f32 = jnp.float32
    not_top = jnp.where(valid & (row > 0), 1.0, 0.0).astype(f32)
    not_bot = jnp.where(valid & (row < H - 1), 1.0, 0.0).astype(f32)
    not_left = jnp.where(valid & (col > 0), 1.0, 0.0).astype(f32)
    not_right = jnp.where(valid & (col < W - 1), 1.0, 0.0).astype(f32)
    zeros = jnp.zeros((HWp,), f32)
    masks = jnp.stack(
        [not_top, not_bot, not_left, not_right, zeros, zeros, zeros, zeros],
        axis=0)  # (8, HWp)

    # Batch planes per grid step; ~4 MiB per block amortizes the ~0.35 us
    # per-step overhead while double-buffered in+out (+ roll temporaries)
    # stays well inside the explicit VMEM limit below.
    plane_bytes = HWp * itemsize
    target_block_bytes = 4 * 1024 * 1024
    bc = max(1, min(P, target_block_bytes // plane_bytes))
    if bc >= 8:
        bc = (bc // 8) * 8                   # keep sublane dim 8-aligned
    bc = min(bc, P)                          # never exceed the number of planes
    # TODO(synk): for planes larger than the block budget (bc == 1 with a
    # multi-MiB plane) a row-tiled variant with 1-row halos would be needed;
    # bc=1 + the VMEM limit below covers planes up to ~4 MiB.

    grid = (pl.cdiv(P, bc),)

    block_bytes = bc * plane_bytes
    # 2x double-buffered in + 2x out + a handful of full-block temporaries;
    # cap at 56 MiB so it is safe on v7x (64 MiB physical VMEM).
    vmem_limit = int(min(56 * 1024 * 1024,
                         max(32 * 1024 * 1024, 12 * block_bytes)))

    kernel = functools.partial(_highpass_kernel, W=W, HWp=HWp)
    out = pl.pallas_call(
        kernel,
        out_shape=jax.ShapeDtypeStruct((P, HWp), x.dtype),
        grid_spec=pltpu.PrefetchScalarGridSpec(
            num_scalar_prefetch=0,
            grid=grid,
            in_specs=[pl.BlockSpec((bc, HWp), lambda i: (i, 0)),
                      pl.BlockSpec((8, HWp), lambda i: (0, 0))],
            out_specs=pl.BlockSpec((bc, HWp), lambda i: (i, 0)),
        ),
        compiler_params=pltpu.CompilerParams(
            dimension_semantics=("parallel",),
            vmem_limit_bytes=vmem_limit),
        cost_estimate=pl.CostEstimate(
            flops=10 * P * HW,
            transcendentals=0,
            bytes_accessed=2 * P * HWp * itemsize + 8 * HWp * 4),
    )(x2, masks)

    if HWp != HW:
        out = out[:, :HW]
    return out.reshape(N, C, H, W)


def _reference(x):
    # Pure-JAX reference for correctness checking (same padding/stride semantics).
    filt = jnp.array([[1.0, 1.0, 1.0],
                      [1.0, -8.0, 1.0],
                      [1.0, 1.0, 1.0]], dtype=jnp.float32)
    N, C, H, W = x.shape
    xf = x.reshape(N * C, 1, H, W)
    w = filt.reshape(1, 1, 3, 3)
    y = jax.lax.conv_general_dilated(
        xf, w, window_strides=(1, 1), padding=((1, 1), (1, 1)),
        dimension_numbers=("NCHW", "OIHW", "NCHW"))
    return y.reshape(N, C, H, W)


if __name__ == "__main__":
    key = jax.random.PRNGKey(0)
    N, C, H, W = 2, 4, 16, 16
    x = jax.random.normal(key, (N, C, H, W), dtype=jnp.float32)

    y = high_pass(x)
    y = jax.block_until_ready(y)

    y_ref = _reference(x)
    assert y.shape == (N, C, H, W)
    assert jnp.allclose(y, y_ref, atol=1e-5, rtol=1e-5), "mismatch vs reference"

    print("KERNEL_OK")
</pallas_src>

<mosaic_0001>
module attributes {stable_mosaic.version = 11 : i64} {
  func.func @_highpass_kernel(%arg0: i32, %arg1: memref<8x256xf32, #tpu.memory_space<vmem>>, %arg2: memref<8x256xf32, #tpu.memory_space<vmem>>, %arg3: memref<8x256xf32, #tpu.memory_space<vmem>>) attributes {dimension_semantics = [#tpu.dimension_semantics<parallel>], iteration_bounds = array<i64: 1>, scalar_prefetch = 0 : i64, scratch_operands = 0 : i64, tpu.core_type = #tpu.core_type<tc>, window_params = [{transform_indices = @transform_0, window_bounds = array<i64: 8, 256>}, {pipeline_mode = #tpu.pipeline_mode<synchronous>, transform_indices = @transform_1, window_bounds = array<i64: 8, 256>}, {transform_indices = @transform_2, window_bounds = array<i64: 8, 256>}]} {
    %c0 = arith.constant 0 : index
    %c0_0 = arith.constant 0 : index
    %0 = vector.load %arg1[%c0, %c0_0] : memref<8x256xf32, #tpu.memory_space<vmem>>, vector<8x256xf32>
    %c0_1 = arith.constant 0 : index
    %c0_2 = arith.constant 0 : index
    %1 = vector.load %arg2[%c0_1, %c0_2] : memref<8x256xf32, #tpu.memory_space<vmem>>, vector<1x256xf32>
    %c1 = arith.constant 1 : index
    %c0_3 = arith.constant 0 : index
    %2 = vector.load %arg2[%c1, %c0_3] : memref<8x256xf32, #tpu.memory_space<vmem>>, vector<1x256xf32>
    %c2 = arith.constant 2 : index
    %c0_4 = arith.constant 0 : index
    %3 = vector.load %arg2[%c2, %c0_4] : memref<8x256xf32, #tpu.memory_space<vmem>>, vector<1x256xf32>
    %c3 = arith.constant 3 : index
    %c0_5 = arith.constant 0 : index
    %4 = vector.load %arg2[%c3, %c0_5] : memref<8x256xf32, #tpu.memory_space<vmem>>, vector<1x256xf32>
    %c16_i32 = arith.constant 16 : i32
    %5 = tpu.dynamic_rotate %0 by %c16_i32 dim 1 : vector<8x256xf32>, i32 -> vector<8x256xf32>
    %c240_i32 = arith.constant 240 : i32
    %6 = tpu.dynamic_rotate %0 by %c240_i32 dim 1 : vector<8x256xf32>, i32 -> vector<8x256xf32>
    %7 = vector.broadcast %1 : vector<1x256xf32> to vector<8x256xf32>
    %8 = arith.mulf %5, %7 : vector<8x256xf32>
    %9 = arith.addf %0, %8 : vector<8x256xf32>
    %10 = vector.broadcast %2 : vector<1x256xf32> to vector<8x256xf32>
    %11 = arith.mulf %6, %10 : vector<8x256xf32>
    %12 = arith.addf %9, %11 : vector<8x256xf32>
    %c1_i32 = arith.constant 1 : i32
    %13 = tpu.dynamic_rotate %12 by %c1_i32 dim 1 : vector<8x256xf32>, i32 -> vector<8x256xf32>
    %c255_i32 = arith.constant 255 : i32
    %14 = tpu.dynamic_rotate %12 by %c255_i32 dim 1 : vector<8x256xf32>, i32 -> vector<8x256xf32>
    %15 = vector.broadcast %3 : vector<1x256xf32> to vector<8x256xf32>
    %16 = arith.mulf %13, %15 : vector<8x256xf32>
    %17 = arith.addf %12, %16 : vector<8x256xf32>
    %18 = vector.broadcast %4 : vector<1x256xf32> to vector<8x256xf32>
    %19 = arith.mulf %14, %18 : vector<8x256xf32>
    %20 = arith.addf %17, %19 : vector<8x256xf32>
    %cst = arith.constant 9.000000e+00 : f32
    %21 = vector.broadcast %cst : f32 to vector<8x256xf32>
    %22 = arith.mulf %21, %0 : vector<8x256xf32>
    %23 = arith.subf %20, %22 : vector<8x256xf32>
    %c0_6 = arith.constant 0 : index
    %c0_7 = arith.constant 0 : index
    %24 = vector.load %arg3[%c0_6, %c0_7] : memref<8x256xf32, #tpu.memory_space<vmem>>, vector<8x256xf32>
    tpu.vector_store %arg3[%c0_6, %c0_7], %23 {strides = array<i32>} : memref<8x256xf32, #tpu.memory_space<vmem>>, vector<8x256xf32>,
    return
  }
  func.func @transform_0(%arg0: i32) -> (i32, i32) {
    %c0_i32 = arith.constant 0 : i32
    %c0_i32_0 = arith.constant 0 : i32
    return %arg0, %c0_i32 : i32, i32
  }
  func.func @transform_1(%arg0: i32) -> (i32, i32) {
    %c0_i32 = arith.constant 0 : i32
    %c0_i32_0 = arith.constant 0 : i32
    %c0_i32_1 = arith.constant 0 : i32
    return %c0_i32, %c0_i32_0 : i32, i32
  }
  func.func @transform_2(%arg0: i32) -> (i32, i32) {
    %c0_i32 = arith.constant 0 : i32
    %c0_i32_0 = arith.constant 0 : i32
    return %arg0, %c0_i32 : i32, i32
  }
}

</mosaic_0001>

<llo_original>
// kernel: tpu_custom_call.1
$region0: #{tpu_custom_call.1}
  #allocation0 [shape = 'u32[]', space=smem, size = 0x4, offset = 0x4, fixed_abs, tag = 'smem constant byte address 0x4 - core index']
  #allocation1 [shape = 'u32[144,128]{1,0:T(1,128)}', space=vmem, size = 0x12000, scoped, tag = 'internal scratch']
  %s0 = inlined_call_operand.hbm [shape: f32[8,256], index: 0, kind: input, shape index: {}]
  %s1 = inlined_call_operand.hbm [shape: f32[8,256], index: 1, kind: input, shape index: {}]
  %s2 = inlined_call_operand.hbm [shape: f32[8,256], index: 2, kind: output, shape index: {}]
  %s3 = sld [smem:[#allocation0]]
  $region26: #{tpu_custom_call.1} parent=0
    _
  %s5 = ssub.s32 1, %s3
  %s6 = scalar_select 0, %s5, %s3
  $region1: #{tpu_custom_call.1} parent=0
    #allocation2 [shape = 'u8[8192]{0}', space=vmem, size = 0x2000, scoped, tag = 'input window, operand 0, single buffered']
    #allocation3 [shape = 's32[1]{0}', space=sflag, size = 0x4, scoped, tag = 'scoped memory for tpu_custom_call.1']
    #allocation4 [shape = 's32[1]{0}', space=sflag, size = 0x4, scoped, tag = 'scoped memory for tpu_custom_call.1']
    #allocation5 [shape = 'u8[8192]{0}', space=vmem, size = 0x2000, scoped, tag = 'input window, operand 1, single buffered']
    #allocation6 [shape = 's32[1]{0}', space=sflag, size = 0x4, scoped, tag = 'scoped memory for tpu_custom_call.1']
    #allocation7 [shape = 'u8[8192]{0}', space=vmem, size = 0x2000, scoped, tag = 'output window, operand 0, single buffered']
    %7 = vsyncpa [#allocation3], 0
    %8 = vsyncpa [#allocation6], 0
    %9 = vsyncpa [#allocation4], 0
    // Predicated region
    $region2: #{tpu_custom_call.1} parent=1 // pred_check
      _
    $region3: #{tpu_custom_call.1} parent=1 // pred_check_branch
      %11 = sbr.rel (0) target = $region5
    $region4: #{tpu_custom_call.1} parent=1 // pred_region
      %s13 = ssub.s32 256, 256
      %14 = vsyncadd [#allocation3], %s13
      %s16 = sshll.u32 [#allocation2], 4
      %s17 = int_to_ptr.vmem [resolvable:$true] %s16
      %19 = dma.hbm_to_vmem [thread:$0]  %s0, 256, %s17, [#allocation3]
    $region5: #{tpu_custom_call.1} parent=1 // pred_fallthru
      _
    // Predicated region
    $region6: #{tpu_custom_call.1} parent=1 // pred_check
      _
    $region7: #{tpu_custom_call.1} parent=1 // pred_check_branch
      %21 = sbr.rel (0) target = $region9
    $region8: #{tpu_custom_call.1} parent=1 // pred_region
      %s23 = ssub.s32 256, 256
      %24 = vsyncadd [#allocation6], %s23
      %s26 = sshll.u32 [#allocation5], 4
      %s27 = int_to_ptr.vmem [resolvable:$true] %s26
      %29 = dma.hbm_to_vmem [thread:$0]  %s1, 256, %s27, [#allocation6]
    $region9: #{tpu_custom_call.1} parent=1 // pred_fallthru
      _
    // Predicated region
    $region10: #{tpu_custom_call.1} parent=1 // pred_check
      _
    $region11: #{tpu_custom_call.1} parent=1 // pred_check_branch
      %31 = sbr.rel (0) target = $region13
    $region12: #{tpu_custom_call.1} parent=1 // pred_region
      %32 = dma.done [#allocation3], 256
    $region13: #{tpu_custom_call.1} parent=1 // pred_fallthru
      _
    // Predicated region
    $region14: #{tpu_custom_call.1} parent=1 // pred_check
      _
    $region15: #{tpu_custom_call.1} parent=1 // pred_check_branch
      %34 = sbr.rel (0) target = $region17
    $region16: #{tpu_custom_call.1} parent=1 // pred_region
      %35 = dma.done [#allocation6], 256
    $region17: #{tpu_custom_call.1} parent=1 // pred_fallthru
      _
    %v36 = vld [vmem:[#allocation2] sm:$0xff]
    %v37 = vld [vmem:[#allocation2 + $0x8] sm:$0xff]
    %v38 = vld [vmem:[#allocation5] ss:$8 sm:$0x3]
    %s39 = scalar_lea.vmem [#allocation5], 1
    %v40 = vld [vmem:[%s39] ss:$8 sm:$0x3]
    %s41 = scalar_lea.vmem [#allocation5], 2
    %v42 = vld [vmem:[%s41] ss:$8 sm:$0x3]
    %s43 = scalar_lea.vmem [#allocation5], 3
    %v44 = vld [vmem:[%s43] ss:$8 sm:$0x3]
    %45 = vrot.lane.b32.xlu0 %v36, 16
    %v46 = vpop.permute.xlu0 %45
    %47 = vrot.lane.b32.xlu0 %v37, 16
    %v48 = vpop.permute.xlu0 %47
    %v49 = vlaneseq
    %v50 = vand.u32 %v49, 127
    %vm51 = vcmp.lt.s32.totalorder %v50, 16
    %v52 = vsel %vm51, %v46, %v48
    %v53 = vsel %vm51, %v48, %v46
    %54 = vrot.lane.b32.xlu0 %v36, 112
    %v55 = vpop.permute.xlu0 %54
    %56 = vrot.lane.b32.xlu0 %v37, 112
    %v57 = vpop.permute.xlu0 %56
    %vm58 = vcmp.lt.s32.totalorder %v50, 112
    %v59 = vsel %vm58, %v55, %v57
    %v60 = vsel %vm58, %v57, %v55
    %v62 = vlaneseq
    %v63 = vshrl.u32 %v62, 7
    %v64 = vsub.s32 0, %v63
    %v65 = vrot.slane %v38, %v64
    %v66 = vlaneseq
    %v67 = vshrl.u32 %v66, 7
    %v68 = vsub.s32 1, %v67
    %v69 = vrot.slane %v38, %v68
    %v72 = vmul.f32 %v53, %v65
    %v73 = vmul.f32 %v52, %v69
    %v74 = vadd.f32 %v36, %v72
    %v75 = vadd.f32 %v37, %v73
    %v77 = vlaneseq
    %v78 = vshrl.u32 %v77, 7
    %v79 = vsub.s32 0, %v78
    %v80 = vrot.slane %v40, %v79
    %v81 = vlaneseq
    %v82 = vshrl.u32 %v81, 7
    %v83 = vsub.s32 1, %v82
    %v84 = vrot.slane %v40, %v83
    %v87 = vmul.f32 %v59, %v80
    %v88 = vmul.f32 %v60, %v84
    %v89 = vadd.f32 %v74, %v87
    %v90 = vadd.f32 %v75, %v88
    %91 = vrot.lane.b32.xlu0 %v89, 1
    %v92 = vpop.permute.xlu0 %91
    %93 = vrot.lane.b32.xlu0 %v90, 1
    %v94 = vpop.permute.xlu0 %93
    %vm95 = vcmp.lt.s32.totalorder %v50, 1
    %v96 = vsel %vm95, %v92, %v94
    %v97 = vsel %vm95, %v94, %v92
    %98 = vrot.lane.b32.xlu0 %v89, 127
    %v99 = vpop.permute.xlu0 %98
    %100 = vrot.lane.b32.xlu0 %v90, 127
    %v101 = vpop.permute.xlu0 %100
    %vm102 = vcmp.lt.s32.totalorder %v50, 127
    %v103 = vsel %vm102, %v99, %v101
    %v104 = vsel %vm102, %v101, %v99
    %v106 = vlaneseq
    %v107 = vshrl.u32 %v106, 7
    %v108 = vsub.s32 0, %v107
    %v109 = vrot.slane %v42, %v108
    %v110 = vlaneseq
    %v111 = vshrl.u32 %v110, 7
    %v112 = vsub.s32 1, %v111
    %v113 = vrot.slane %v42, %v112
    %v116 = vmul.f32 %v97, %v109
    %v117 = vmul.f32 %v96, %v113
    %v118 = vadd.f32 %v89, %v116
    %v119 = vadd.f32 %v90, %v117
    %v121 = vlaneseq
    %v122 = vshrl.u32 %v121, 7
    %v123 = vsub.s32 0, %v122
    %v124 = vrot.slane %v44, %v123
    %v125 = vlaneseq
    %v126 = vshrl.u32 %v125, 7
    %v127 = vsub.s32 1, %v126
    %v128 = vrot.slane %v44, %v127
    %v131 = vmul.f32 %v103, %v124
    %v132 = vmul.f32 %v104, %v128
    %v133 = vadd.f32 %v118, %v131
    %v134 = vadd.f32 %v119, %v132
    %v135 = vmul.f32 %v36, 9.0
    %v136 = vmul.f32 %v37, 9.0
    %v137 = vsub.f32 %v133, %v135
    %v138 = vsub.f32 %v134, %v136
    %139 = vst [vmem:[#allocation7] sm:$0xff] %v137
    %140 = vst [vmem:[#allocation7 + $0x8] sm:$0xff] %v138
    // Predicated region
    $region18: #{tpu_custom_call.1} parent=1 // pred_check
      _
    $region19: #{tpu_custom_call.1} parent=1 // pred_check_branch
      %142 = sbr.rel (0) target = $region21
    $region20: #{tpu_custom_call.1} parent=1 // pred_region
      %s144 = ssub.s32 256, 256
      %145 = vsyncadd [#allocation4], %s144
      %s147 = sshll.u32 [#allocation7], 4
      %s148 = int_to_ptr.vmem [resolvable:$true] %s147
      %150 = dma.vmem_to_hbm [thread:$0]  %s148, 256, %s2, [#allocation4]
    $region21: #{tpu_custom_call.1} parent=1 // pred_fallthru
      _
    // Predicated region
    $region22: #{tpu_custom_call.1} parent=1 // pred_check
      _
    $region23: #{tpu_custom_call.1} parent=1 // pred_check_branch
      %152 = sbr.rel (0) target = $region25
    $region24: #{tpu_custom_call.1} parent=1 // pred_region
      %153 = dma.done [#allocation4], 256
    $region25: #{tpu_custom_call.1} parent=1 // pred_fallthru
      _
    %154 = vsyncpa [#allocation3], 1
    %155 = vsyncpa [#allocation6], 1
    %156 = vsyncpa [#allocation4], 1

</llo_original>
